<compile_context>
chip_gen: v5e
topology: v5e:2x2
jax: 0.10.0
libtpu: 0.0.40
codegen_flags: <defaults>
</compile_context>

<pallas_src>
import jax
import jax.numpy as jnp
from jax.experimental import pallas as pl
from jax.experimental.pallas import tpu as pltpu

MAX_TILE_B = 8192     # batch rows per grid step (x tile f32 @ n_obs=16 -> 512 KiB)
MIN_SPLIT_B = 1024    # once B is this big, force >=2 grid steps (v7x megacore)


def _round_up(n, m):
    return ((n + m - 1) // m) * m


def _choose_tiling(B, max_tile_b):
    """Pick (tile_b, num_tiles) s.t. tile_b is 8-aligned, <= max_tile_b, the last
    tile is mostly full, and there are >=2 tiles for large batches (megacore)."""
    num_tiles = max(1, pl.cdiv(B, max_tile_b))
    if B >= MIN_SPLIT_B:
        num_tiles = max(num_tiles, 2)
    tile_b = min(_round_up(pl.cdiv(B, num_tiles), 8), _round_up(max_tile_b, 8))
    num_tiles = pl.cdiv(B, tile_b)
    return tile_b, num_tiles


def dqn_mlp_kernel(x_ref, w1_ref, b1_ref, w2_ref, b2_ref, w3_ref, b3_ref, out_ref):
    # f32 -> bf16 cast on the VPU (free: VPU has huge slack in this kernel).
    x = x_ref[...].astype(jnp.bfloat16)
    # hidden layer 1: bf16 matmul on the MXU, f32 accumulate, bias + ReLU in f32
    h = jnp.dot(x, w1_ref[...], preferred_element_type=jnp.float32)
    h = jnp.maximum(h + b1_ref[...], 0.0)
    # hidden layer 2
    h = jnp.dot(h.astype(w2_ref.dtype), w2_ref[...], preferred_element_type=jnp.float32)
    h = jnp.maximum(h + b2_ref[...], 0.0)
    # output layer: narrow (n_actions-wide) store -- masked but ~32x less HBM traffic
    out = jnp.dot(h.astype(w3_ref.dtype), w3_ref[...], preferred_element_type=jnp.float32)
    out_ref[...] = (out + b3_ref[...]).astype(out_ref.dtype)


def dqn_forward(x, params, *, max_tile_b=MAX_TILE_B):
    """x: (B, n_obs) f32. params from init_dqn_params (bf16 weights, f32 biases).
    Returns Q-values (B, n_actions) f32, matching the PyTorch forward."""
    B, n_obs = x.shape
    n_actions = params["n_actions"]
    w1, b1 = params["w1"], params["b1"]
    w2, b2 = params["w2"], params["b2"]
    w3, b3 = params["w3"], params["b3"]
    hidden = w1.shape[1]

    tile_b, num_tiles = _choose_tiling(B, max_tile_b)
    grid = (num_tiles,)

    flops = 2 * B * (n_obs * hidden + hidden * hidden + hidden * n_actions)
    bytes_accessed = (
        B * n_obs * 4                       # x read (f32, cast happens in-kernel)
        + B * n_actions * 4                 # narrow f32 output write
        + sum(int(a.size) * a.dtype.itemsize for a in (w1, b1, w2, b2, w3, b3))
    )

    out = pl.pallas_call(
        dqn_mlp_kernel,
        out_shape=jax.ShapeDtypeStruct((B, n_actions), jnp.float32),
        grid=grid,
        in_specs=[
            # batch-tiled, pipelined input (f32; Pallas handles the ragged last tile)
            pl.BlockSpec((tile_b, n_obs), lambda i: (i, 0)),
            # weights / biases: constant index_map -> VMEM-resident, no re-DMA
            pl.BlockSpec(w1.shape, lambda i: (0, 0)),
            pl.BlockSpec(b1.shape, lambda i: (0, 0)),
            pl.BlockSpec(w2.shape, lambda i: (0, 0)),
            pl.BlockSpec(b2.shape, lambda i: (0, 0)),
            pl.BlockSpec(w3.shape, lambda i: (0, 0)),
            pl.BlockSpec(b3.shape, lambda i: (0, 0)),
        ],
        out_specs=pl.BlockSpec((tile_b, n_actions), lambda i: (i, 0)),
        compiler_params=pltpu.CompilerParams(
            dimension_semantics=("parallel",),   # batch tiles shard across v7x TCs
        ),
        cost_estimate=pl.CostEstimate(
            flops=flops, transcendentals=0, bytes_accessed=bytes_accessed),
    )(x, w1, b1, w2, b2, w3, b3)

    return out


def init_dqn_params(key, n_observations, n_actions, hidden=32):
    """Deterministic init mimicking nn.Linear: U(-1/sqrt(fan_in), 1/sqrt(fan_in)).
    Weights stored transposed (in_features, out_features) in bf16; biases f32."""
    layer_dims = [n_observations, hidden, hidden, n_actions]
    params = {"n_actions": n_actions}
    for i in range(3):
        fan_in, fan_out = layer_dims[i], layer_dims[i + 1]
        key, kw, kb = jax.random.split(key, 3)
        bound = 1.0 / (fan_in ** 0.5)
        w = jax.random.uniform(kw, (fan_in, fan_out), jnp.float32,
                               minval=-bound, maxval=bound)
        b = jax.random.uniform(kb, (1, fan_out), jnp.float32,
                               minval=-bound, maxval=bound)
        params[f"w{i+1}"] = w.astype(jnp.bfloat16)  # bf16 operand for the MXU
        params[f"b{i+1}"] = b                       # bias added on the f32 accumulator
    return params


def dqn_reference(x, params):
    """Pure-JAX reference mirroring the kernel math (bf16 operands, f32 accumulate)."""
    def mm(a, w):
        return jnp.dot(a.astype(jnp.bfloat16).astype(jnp.float32),
                       w.astype(jnp.float32),
                       precision=jax.lax.Precision.HIGHEST)
    h = jnp.maximum(mm(x, params["w1"]) + params["b1"], 0.0)
    h = jnp.maximum(mm(h, params["w2"]) + params["b2"], 0.0)
    return mm(h, params["w3"]) + params["b3"]


if __name__ == "__main__":
    key = jax.random.PRNGKey(0)
    B, n_obs, n_actions = 8, 16, 4

    key, kx = jax.random.split(key)
    x = jax.random.normal(kx, (B, n_obs), jnp.float32)
    params = init_dqn_params(key, n_obs, n_actions, hidden=32)

    out = jax.block_until_ready(dqn_forward(x, params))

    ref = dqn_reference(x, params)
    assert out.shape == (B, n_actions)
    assert jnp.allclose(out, ref, atol=1e-3, rtol=1e-3), "mismatch vs reference"

    print("KERNEL_OK")
</pallas_src>

<mosaic_0001>
module attributes {stable_mosaic.version = 11 : i64} {
  func.func @dqn_mlp_kernel(%arg0: i32, %arg1: memref<8x16xf32, #tpu.memory_space<vmem>>, %arg2: memref<16x32xbf16, #tpu.memory_space<vmem>>, %arg3: memref<1x32xf32, #tpu.memory_space<vmem>>, %arg4: memref<32x32xbf16, #tpu.memory_space<vmem>>, %arg5: memref<1x32xf32, #tpu.memory_space<vmem>>, %arg6: memref<32x4xbf16, #tpu.memory_space<vmem>>, %arg7: memref<1x4xf32, #tpu.memory_space<vmem>>, %arg8: memref<8x4xf32, #tpu.memory_space<vmem>>) attributes {dimension_semantics = [#tpu.dimension_semantics<parallel>], iteration_bounds = array<i64: 1>, scalar_prefetch = 0 : i64, scratch_operands = 0 : i64, tpu.core_type = #tpu.core_type<tc>, window_params = [{transform_indices = @transform_0, window_bounds = array<i64: 8, 16>}, {pipeline_mode = #tpu.pipeline_mode<synchronous>, transform_indices = @transform_1, window_bounds = array<i64: 16, 32>}, {pipeline_mode = #tpu.pipeline_mode<synchronous>, transform_indices = @transform_2, window_bounds = array<i64: 1, 32>}, {pipeline_mode = #tpu.pipeline_mode<synchronous>, transform_indices = @transform_3, window_bounds = array<i64: 32, 32>}, {pipeline_mode = #tpu.pipeline_mode<synchronous>, transform_indices = @transform_4, window_bounds = array<i64: 1, 32>}, {pipeline_mode = #tpu.pipeline_mode<synchronous>, transform_indices = @transform_5, window_bounds = array<i64: 32, 4>}, {pipeline_mode = #tpu.pipeline_mode<synchronous>, transform_indices = @transform_6, window_bounds = array<i64: 1, 4>}, {transform_indices = @transform_7, window_bounds = array<i64: 8, 4>}]} {
    %c0 = arith.constant 0 : index
    %c0_0 = arith.constant 0 : index
    %0 = vector.load %arg1[%c0, %c0_0] : memref<8x16xf32, #tpu.memory_space<vmem>>, vector<8x16xf32>
    %1 = arith.truncf %0 : vector<8x16xf32> to vector<8x16xbf16>
    %c0_1 = arith.constant 0 : index
    %c0_2 = arith.constant 0 : index
    %2 = vector.load %arg2[%c0_1, %c0_2] : memref<16x32xbf16, #tpu.memory_space<vmem>>, vector<16x32xbf16>
    %cst = arith.constant dense<0.000000e+00> : vector<8x32xf32>
    %3 = tpu.matmul %1, %2, %cst {dimension_numbers = #tpu.dot_dimension_numbers<[1], [0], [0], [1], [0, 0, 1, 1], [], []>} : vector<8x16xbf16>, vector<16x32xbf16>, vector<8x32xf32> -> vector<8x32xf32>
    %c0_3 = arith.constant 0 : index
    %c0_4 = arith.constant 0 : index
    %4 = vector.load %arg3[%c0_3, %c0_4] : memref<1x32xf32, #tpu.memory_space<vmem>>, vector<1x32xf32>
    %5 = vector.broadcast %4 : vector<1x32xf32> to vector<8x32xf32>
    %6 = arith.addf %3, %5 : vector<8x32xf32>
    %cst_5 = arith.constant 0.000000e+00 : f32
    %7 = vector.broadcast %cst_5 : f32 to vector<8x32xf32>
    %8 = arith.maximumf %6, %7 : vector<8x32xf32>
    %9 = arith.truncf %8 : vector<8x32xf32> to vector<8x32xbf16>
    %c0_6 = arith.constant 0 : index
    %c0_7 = arith.constant 0 : index
    %10 = vector.load %arg4[%c0_6, %c0_7] : memref<32x32xbf16, #tpu.memory_space<vmem>>, vector<32x32xbf16>
    %cst_8 = arith.constant dense<0.000000e+00> : vector<8x32xf32>
    %11 = tpu.matmul %9, %10, %cst_8 {dimension_numbers = #tpu.dot_dimension_numbers<[1], [0], [0], [1], [0, 0, 1, 1], [], []>} : vector<8x32xbf16>, vector<32x32xbf16>, vector<8x32xf32> -> vector<8x32xf32>
    %c0_9 = arith.constant 0 : index
    %c0_10 = arith.constant 0 : index
    %12 = vector.load %arg5[%c0_9, %c0_10] : memref<1x32xf32, #tpu.memory_space<vmem>>, vector<1x32xf32>
    %13 = vector.broadcast %12 : vector<1x32xf32> to vector<8x32xf32>
    %14 = arith.addf %11, %13 : vector<8x32xf32>
    %cst_11 = arith.constant 0.000000e+00 : f32
    %15 = vector.broadcast %cst_11 : f32 to vector<8x32xf32>
    %16 = arith.maximumf %14, %15 : vector<8x32xf32>
    %17 = arith.truncf %16 : vector<8x32xf32> to vector<8x32xbf16>
    %c0_12 = arith.constant 0 : index
    %c0_13 = arith.constant 0 : index
    %18 = vector.load %arg6[%c0_12, %c0_13] : memref<32x4xbf16, #tpu.memory_space<vmem>>, vector<32x4xbf16>
    %cst_14 = arith.constant dense<0.000000e+00> : vector<8x4xf32>
    %19 = tpu.matmul %17, %18, %cst_14 {dimension_numbers = #tpu.dot_dimension_numbers<[1], [0], [0], [1], [0, 0, 1, 1], [], []>} : vector<8x32xbf16>, vector<32x4xbf16>, vector<8x4xf32> -> vector<8x4xf32>
    %c0_15 = arith.constant 0 : index
    %c0_16 = arith.constant 0 : index
    %20 = vector.load %arg7[%c0_15, %c0_16] : memref<1x4xf32, #tpu.memory_space<vmem>>, vector<1x4xf32>
    %21 = vector.broadcast %20 : vector<1x4xf32> to vector<8x4xf32>
    %22 = arith.addf %19, %21 : vector<8x4xf32>
    %c0_17 = arith.constant 0 : index
    %c0_18 = arith.constant 0 : index
    %23 = vector.load %arg8[%c0_17, %c0_18] : memref<8x4xf32, #tpu.memory_space<vmem>>, vector<8x4xf32>
    tpu.vector_store %arg8[%c0_17, %c0_18], %22 {strides = array<i32>} : memref<8x4xf32, #tpu.memory_space<vmem>>, vector<8x4xf32>,
    return
  }
  func.func @transform_0(%arg0: i32) -> (i32, i32) {
    %c0_i32 = arith.constant 0 : i32
    %c0_i32_0 = arith.constant 0 : i32
    return %arg0, %c0_i32 : i32, i32
  }
  func.func @transform_1(%arg0: i32) -> (i32, i32) {
    %c0_i32 = arith.constant 0 : i32
    %c0_i32_0 = arith.constant 0 : i32
    %c0_i32_1 = arith.constant 0 : i32
    return %c0_i32, %c0_i32_0 : i32, i32
  }
  func.func @transform_2(%arg0: i32) -> (i32, i32) {
    %c0_i32 = arith.constant 0 : i32
    %c0_i32_0 = arith.constant 0 : i32
    %c0_i32_1 = arith.constant 0 : i32
    return %c0_i32, %c0_i32_0 : i32, i32
  }
  func.func @transform_3(%arg0: i32) -> (i32, i32) {
    %c0_i32 = arith.constant 0 : i32
    %c0_i32_0 = arith.constant 0 : i32
    %c0_i32_1 = arith.constant 0 : i32
    return %c0_i32, %c0_i32_0 : i32, i32
  }
  func.func @transform_4(%arg0: i32) -> (i32, i32) {
    %c0_i32 = arith.constant 0 : i32
    %c0_i32_0 = arith.constant 0 : i32
    %c0_i32_1 = arith.constant 0 : i32
    return %c0_i32, %c0_i32_0 : i32, i32
  }
  func.func @transform_5(%arg0: i32) -> (i32, i32) {
    %c0_i32 = arith.constant 0 : i32
    %c0_i32_0 = arith.constant 0 : i32
    %c0_i32_1 = arith.constant 0 : i32
    return %c0_i32, %c0_i32_0 : i32, i32
  }
  func.func @transform_6(%arg0: i32) -> (i32, i32) {
    %c0_i32 = arith.constant 0 : i32
    %c0_i32_0 = arith.constant 0 : i32
    %c0_i32_1 = arith.constant 0 : i32
    return %c0_i32, %c0_i32_0 : i32, i32
  }
  func.func @transform_7(%arg0: i32) -> (i32, i32) {
    %c0_i32 = arith.constant 0 : i32
    %c0_i32_0 = arith.constant 0 : i32
    return %arg0, %c0_i32 : i32, i32
  }
}

</mosaic_0001>

<llo_original>
// kernel: tpu_custom_call.1
$region0: #{tpu_custom_call.1}
  #allocation0 [shape = 'u32[]', space=smem, size = 0x4, offset = 0x4, fixed_abs, tag = 'smem constant byte address 0x4 - core index']
  #allocation1 [shape = 'u32[72,128]{1,0:T(1,128)}', space=vmem, size = 0x9000, scoped, tag = 'internal scratch']
  %s0 = inlined_call_operand.hbm [shape: f32[8,16], index: 0, kind: input, shape index: {}]
  %s1 = inlined_call_operand.hbm [shape: bf16[16,32], index: 1, kind: input, shape index: {}]
  %s2 = inlined_call_operand.vmem [shape: f32[1,32], index: 2, kind: input, shape index: {}]
  %s3 = inlined_call_operand.vmem [shape: bf16[32,32], index: 3, kind: input, shape index: {}]
  %s4 = inlined_call_operand.vmem [shape: f32[1,32], index: 4, kind: input, shape index: {}]
  %s5 = inlined_call_operand.vmem [shape: bf16[32,4], index: 5, kind: input, shape index: {}]
  %s6 = inlined_call_operand.vmem [shape: f32[1,4], index: 6, kind: input, shape index: {}]
  %s7 = inlined_call_operand.vmem [shape: f32[8,4], index: 7, kind: output, shape index: {}]
  %s8 = sld [smem:[#allocation0]]
  $region46: #{tpu_custom_call.1} parent=0
    _
  %s10 = ssub.s32 1, %s8
  %s11 = scalar_select 0, %s10, %s8
  $region1: #{tpu_custom_call.1} parent=0
    #allocation2 [shape = 'u8[4096]{0}', space=vmem, size = 0x1000, scoped, tag = 'input window, operand 0, single buffered']
    #allocation3 [shape = 's32[1]{0}', space=sflag, size = 0x4, scoped, tag = 'scoped memory for tpu_custom_call.1']
    #allocation4 [shape = 'u8[4096]{0}', space=vmem, size = 0x1000, scoped, tag = 'input window, operand 1, single buffered']
    #allocation5 [shape = 's32[1]{0}', space=sflag, size = 0x4, scoped, tag = 'scoped memory for tpu_custom_call.1']
    %12 = vsyncpa [#allocation3], 0
    %13 = vsyncpa [#allocation5], 0
    // Predicated region
    $region2: #{tpu_custom_call.1} parent=1 // pred_check
      _
    $region3: #{tpu_custom_call.1} parent=1 // pred_check_branch
      %15 = sbr.rel (0) target = $region5
    $region4: #{tpu_custom_call.1} parent=1 // pred_region
      %17 = vsyncadd [#allocation3], 0
      %s19 = sshll.u32 %s0, 4
      %s20 = int_to_ptr.hbm [resolvable:$true] %s19
      %s21 = sshll.u32 [#allocation2], 4
      %s22 = int_to_ptr.vmem [resolvable:$true] %s21
      %24 = dma.hbm_to_vmem [thread:$0]  %s20, 128, %s22, [#allocation3]
    $region5: #{tpu_custom_call.1} parent=1 // pred_fallthru
      _
    // Predicated region
    $region6: #{tpu_custom_call.1} parent=1 // pred_check
      _
    $region7: #{tpu_custom_call.1} parent=1 // pred_check_branch
      %26 = sbr.rel (0) target = $region9
    $region8: #{tpu_custom_call.1} parent=1 // pred_region
      %28 = vsyncadd [#allocation5], 0
      %s29 = sshll.u32 %s1, 4
      %s30 = int_to_ptr.hbm [resolvable:$true] %s29
      %s31 = sshll.u32 [#allocation4], 4
      %s32 = int_to_ptr.vmem [resolvable:$true] %s31
      %37 = dma.hbm_to_vmem [thread:$0]  %s30, 128, %s32, [#allocation5], 64, 64, 4
    $region9: #{tpu_custom_call.1} parent=1 // pred_fallthru
      _
    // Predicated region
    $region10: #{tpu_custom_call.1} parent=1 // pred_check
      _
    $region11: #{tpu_custom_call.1} parent=1 // pred_check_branch
      %39 = sbr.rel (0) target = $region13
    $region12: #{tpu_custom_call.1} parent=1 // pred_region
      _
    $region13: #{tpu_custom_call.1} parent=1 // pred_fallthru
      _
    // Predicated region
    $region14: #{tpu_custom_call.1} parent=1 // pred_check
      _
    $region15: #{tpu_custom_call.1} parent=1 // pred_check_branch
      %41 = sbr.rel (0) target = $region17
    $region16: #{tpu_custom_call.1} parent=1 // pred_region
      _
    $region17: #{tpu_custom_call.1} parent=1 // pred_fallthru
      _
    // Predicated region
    $region18: #{tpu_custom_call.1} parent=1 // pred_check
      _
    $region19: #{tpu_custom_call.1} parent=1 // pred_check_branch
      %43 = sbr.rel (0) target = $region21
    $region20: #{tpu_custom_call.1} parent=1 // pred_region
      _
    $region21: #{tpu_custom_call.1} parent=1 // pred_fallthru
      _
    // Predicated region
    $region22: #{tpu_custom_call.1} parent=1 // pred_check
      _
    $region23: #{tpu_custom_call.1} parent=1 // pred_check_branch
      %45 = sbr.rel (0) target = $region25
    $region24: #{tpu_custom_call.1} parent=1 // pred_region
      _
    $region25: #{tpu_custom_call.1} parent=1 // pred_fallthru
      _
    // Predicated region
    $region26: #{tpu_custom_call.1} parent=1 // pred_check
      _
    $region27: #{tpu_custom_call.1} parent=1 // pred_check_branch
      %47 = sbr.rel (0) target = $region29
    $region28: #{tpu_custom_call.1} parent=1 // pred_region
      _
    $region29: #{tpu_custom_call.1} parent=1 // pred_fallthru
      _
    // Predicated region
    $region30: #{tpu_custom_call.1} parent=1 // pred_check
      _
    $region31: #{tpu_custom_call.1} parent=1 // pred_check_branch
      %49 = sbr.rel (0) target = $region33
    $region32: #{tpu_custom_call.1} parent=1 // pred_region
      %51 = dma.done [#allocation3], 128
    $region33: #{tpu_custom_call.1} parent=1 // pred_fallthru
      _
    // Predicated region
    $region34: #{tpu_custom_call.1} parent=1 // pred_check
      _
    $region35: #{tpu_custom_call.1} parent=1 // pred_check_branch
      %53 = sbr.rel (0) target = $region37
    $region36: #{tpu_custom_call.1} parent=1 // pred_region
      %55 = dma.done [#allocation5], 128
    $region37: #{tpu_custom_call.1} parent=1 // pred_fallthru
      _
    %v57 = vld [vmem:[#allocation2] sm:$0xff]
    %v58 = vpack.c.bf16 %v57, %v57
    %v59 = vld [vmem:[#allocation4] sm:$0xf]
    %v60 = vld [vmem:[#allocation4 + $0x4] sm:$0xf]
    %v61 = vld [vmem:[%s2] sm:$0x1]
    %v63 = vperm.slane %v61, 0
    %v67 = vunpack.c.l.b16 %v59
    %v68 = vunpack.c.l.b16 %v60
    %v69 = vpack.c.b16 %v68, %v67
    %vm71 = vcmask 130048
    %v73 = vsel %vm71, %v58, 0
    %75 = vmatpush.bf16.msra.mxu0 0
    %76 = vmatpush.bf16.msra.mxu0 0
    %77 = vmatpush.bf16.msra.mxu0 0
    %78 = vmatpush.bf16.msra.mxu0 0
    %79 = vmatpush.bf16.msra.mxu0 0
    %80 = vmatpush.bf16.msra.mxu0 0
    %81 = vmatpush.bf16.msra.mxu0 0
    %82 = vmatpush.bf16.msra.mxu0 %v69
    %83 = vmatmul.bf16.gmra.mxu0 %v73
    %v84 = vpop.f32.mrf.mxu0
    %v85 = vadd.f32 %v63, %v84
    %v86 = vpop.f32.mrf.mxu0
    %87 = vdwg.mxu0
    %v88 = vmax.f32 %v85, 0.0
    %v89 = vpack.c.bf16 %v88, %v88
    %v90 = vld [vmem:[%s3] sm:$0xf]
    %v91 = vld [vmem:[%s3 + $0x4] sm:$0xf]
    %v92 = vld [vmem:[%s3 + $0x8] sm:$0xf]
    %v93 = vld [vmem:[%s3 + $0xc] sm:$0xf]
    %v94 = vld [vmem:[%s4] sm:$0x1]
    %v96 = vperm.slane %v94, 0
    %v102 = vunpack.c.l.b16 %v90
    %v103 = vunpack.c.l.b16 %v91
    %v104 = vunpack.c.l.b16 %v92
    %v105 = vunpack.c.l.b16 %v93
    %v106 = vpack.c.b16 %v103, %v102
    %v107 = vpack.c.b16 %v105, %v104
    %vm110 = vcmask 261120
    %v112 = vsel %vm110, %v89, 0
    %114 = vmatpush.bf16.msra.mxu0 0
    %115 = vmatpush.bf16.msra.mxu0 0
    %116 = vmatpush.bf16.msra.mxu0 0
    %117 = vmatpush.bf16.msra.mxu0 0
    %118 = vmatpush.bf16.msra.mxu0 0
    %119 = vmatpush.bf16.msra.mxu0 0
    %120 = vmatpush.bf16.msra.mxu0 %v107
    %121 = vmatpush.bf16.msra.mxu0 %v106
    %122 = vmatmul.bf16.gmra.mxu0 %v112
    %v123 = vpop.f32.mrf.mxu0
    %v124 = vadd.f32 %v96, %v123
    %v125 = vpop.f32.mrf.mxu0
    %126 = vdwg.mxu0
    %v127 = vmax.f32 %v124, 0.0
    %v128 = vpack.c.bf16 %v127, %v127
    %v129 = vld [vmem:[%s5] sm:$0xf]
    %v130 = vld [vmem:[%s5 + $0x4] sm:$0xf]
    %v131 = vld [vmem:[%s5 + $0x8] sm:$0xf]
    %v132 = vld [vmem:[%s5 + $0xc] sm:$0xf]
    %v133 = vld [vmem:[%s6] sm:$0x1]
    %v135 = vperm.slane %v133, 0
    %v141 = vunpack.c.l.b16 %v129
    %v142 = vunpack.c.l.b16 %v130
    %v143 = vunpack.c.l.b16 %v131
    %v144 = vunpack.c.l.b16 %v132
    %v145 = vpack.c.b16 %v142, %v141
    %v146 = vpack.c.b16 %v144, %v143
    %v150 = vsel %vm110, %v128, 0
    %152 = vmatpush.bf16.msra.mxu0 0
    %153 = vmatpush.bf16.msra.mxu0 0
    %154 = vmatpush.bf16.msra.mxu0 0
    %155 = vmatpush.bf16.msra.mxu0 0
    %156 = vmatpush.bf16.msra.mxu0 0
    %157 = vmatpush.bf16.msra.mxu0 0
    %158 = vmatpush.bf16.msra.mxu0 %v146
    %159 = vmatpush.bf16.msra.mxu0 %v145
    %160 = vmatmul.bf16.gmra.mxu0 %v150
    %v161 = vpop.f32.mrf.mxu0
    %v162 = vadd.f32 %v135, %v161
    %v163 = vpop.f32.mrf.mxu0
    %164 = vdwg.mxu0
    %vm165 = vcmask 31744
    %166 = vst.msk [vmem:[%s7] sm:$0xff] %vm165, %v162
    // Predicated region
    $region38: #{tpu_custom_call.1} parent=1 // pred_check
      _
    $region39: #{tpu_custom_call.1} parent=1 // pred_check_branch
      %168 = sbr.rel (0) target = $region41
    $region40: #{tpu_custom_call.1} parent=1 // pred_region
      _
    $region41: #{tpu_custom_call.1} parent=1 // pred_fallthru
      _
    // Predicated region
    $region42: #{tpu_custom_call.1} parent=1 // pred_check
      _
    $region43: #{tpu_custom_call.1} parent=1 // pred_check_branch
      %170 = sbr.rel (0) target = $region45
    $region44: #{tpu_custom_call.1} parent=1 // pred_region
      _
    $region45: #{tpu_custom_call.1} parent=1 // pred_fallthru
      _
    %171 = vsyncpa [#allocation3], 1
    %172 = vsyncpa [#allocation5], 1

</llo_original>
